<compile_context>
chip_gen: v7x
topology: tpu7x:2x2x1
jax: 0.10.0
libtpu: 0.0.40
codegen_flags: <defaults>
</compile_context>

<pallas_src>
import jax
import jax.numpy as jnp
from jax.experimental import pallas as pl
from jax.experimental.pallas import tpu as pltpu


# ----------------------------- kernels ------------------------------------- #

def _make_single_kernel(no_imgnorm: bool):
    """Weight fully resident: one K step, no scratch, no pl.when."""
    def kernel(scale_ref, x_ref, v_ref, b_ref, o_ref):
        # x_ref: (TB, D), v_ref: (E, D), b_ref: (1, E), o_ref: (TB, E)
        feats = jax.lax.dot_general(
            x_ref[...], v_ref[...],
            dimension_numbers=(((1,), (1,)), ((), ())),   # NT: no weight transpose
            preferred_element_type=jnp.float32,
        )
        feats = feats * scale_ref[0, 0] + b_ref[...]
        if not no_imgnorm:
            nrm = jnp.sqrt(jnp.sum(feats * feats, axis=-1, keepdims=True)) + 1e-8
            feats = feats * pl.reciprocal(nrm, approx=False)
        o_ref[...] = feats.astype(o_ref.dtype)
    return kernel


def _make_ktiled_kernel(no_imgnorm: bool):
    """K-reduction over img_dim; requires num_programs(1) >= 2 (guaranteed by wrapper)."""
    def kernel(scale_ref, x_ref, v_ref, b_ref, o_ref, acc_ref):
        # x_ref: (TB, TK), v_ref: (E, TK), b_ref: (1, E), o_ref: (TB, E)
        # acc_ref: (TB, E) f32 VMEM scratch, persists across the K grid axis.
        k = pl.program_id(1)
        last = pl.num_programs(1) - 1

        partial = jax.lax.dot_general(
            x_ref[...], v_ref[...],
            dimension_numbers=(((1,), (1,)), ((), ())),
            preferred_element_type=jnp.float32,
        )

        @pl.when(k == 0)
        def _first():            # no zero-init + RMW: just overwrite
            acc_ref[...] = partial

        @pl.when(jnp.logical_and(k > 0, k < last))
        def _middle():
            acc_ref[...] += partial

        @pl.when(k == last)
        def _last():             # fuse final partial with the epilogue, no acc writeback
            feats = acc_ref[...] + partial
            feats = feats * scale_ref[0, 0] + b_ref[...]
            if not no_imgnorm:
                nrm = jnp.sqrt(jnp.sum(feats * feats, axis=-1, keepdims=True)) + 1e-8
                feats = feats * pl.reciprocal(nrm, approx=False)
            o_ref[...] = feats.astype(o_ref.dtype)
    return kernel


# --------------------------- helper utilities ------------------------------ #

def _round_up(x, m):
    return ((x + m - 1) // m) * m


def _vmem_capacity_bytes():
    try:
        cap = getattr(pltpu.get_tpu_info(), "vmem_capacity_bytes", None)
        if cap:
            return int(cap)
    except Exception:
        pass
    return 64 << 20   # conservative default (v7x per-TensorCore)


def _num_tensorcores():
    try:
        dev = jax.devices()[0]
        for attr in ("num_cores", "core_count", "num_tensorcores"):
            val = getattr(dev, attr, None)
            if isinstance(val, int) and 1 <= val <= 16:
                return val
    except Exception:
        pass
    return 1


def _vmem_footprint(bb, bk, d_full, e, in_isz, out_isz):
    """Double-buffered VMEM bytes for one pipeline stage."""
    ktiled = bk < d_full
    return (2 * bb * bk * in_isz          # x tile (double-buffered)
            + 2 * e * bk * in_isz         # weight tile (double-buffered)
            + 2 * bb * e * out_isz        # output tile (double-buffered)
            + (bb * e * 4 if ktiled else 0)   # f32 accumulator scratch
            + 2 * e * 4)                  # bias


def _choose_blocks(B, Dp, Ep, in_isz, out_isz, vmem_cap, num_cores,
                   block_b=None, block_k=None):
    budget = (vmem_cap * 3) // 4          # headroom for compiler scratch / semaphores

    def fp(bb, bk):
        return _vmem_footprint(bb, bk, Dp, Ep, in_isz, out_isz)

    auto_bb = block_b is None
    if auto_bb:
        if B <= 128:
            block_b = max(8, _round_up(B, 8))
        else:
            # In the weight-streaming regime the weight is re-read once per batch
            # tile -> maximize block_b first; probe with the K tile we would use.
            probe_bk = Dp if fp(128, Dp) <= budget else min(Dp, 256)
            cands = [c for c in (1024, 512, 256, 128) if c <= _round_up(B, 128)]
            fitting = [c for c in cands if fp(c, probe_bk) <= budget] or [128]
            block_b = next((c for c in fitting if B % c == 0), fitting[0])
    else:
        assert block_b % 8 == 0, "block_b must be a multiple of 8"

    Bp = _round_up(B, block_b)

    # Multi-TensorCore chips (v7x): keep >=2 batch tiles so the parallel axis shards.
    if auto_bb and num_cores >= 2:
        while Bp // block_b < num_cores and block_b > 128 and block_b % 2 == 0:
            block_b //= 2
            Bp = _round_up(B, block_b)

    if block_k is None:
        if fp(block_b, Dp) <= budget:
            block_k = Dp                               # weight resident: single K step
        else:
            cands = [c for c in (2048, 1024, 512, 256) if c <= Dp]
            block_k = next((c for c in cands if fp(block_b, c) <= budget), 256)
    else:
        assert block_k % 128 == 0, "block_k must be a multiple of 128"
    Dp = _round_up(Dp, block_k)

    return block_b, block_k, Bp, Dp


def precompute_encoder_params(weight_v, weight_g, bias, compute_dtype=jnp.bfloat16):
    """Hoist constant-parameter work (weight-norm scale, dtype cast, bias reshape)
    out of the per-call path.  Call once, reuse across invocations."""
    E, _ = weight_v.shape
    v32 = weight_v.astype(jnp.float32)
    # weight_norm(dim=None): W_eff = (g / ||v||_F) * v  -> scalar scale, applied
    # to the (TB, E) matmul OUTPUT inside the kernel instead of rescaling v.
    scale = (jnp.asarray(weight_g, jnp.float32).reshape(())
             / jnp.sqrt(jnp.sum(v32 * v32)))
    return dict(
        scale2d=scale.reshape(1, 1),
        v=weight_v.astype(compute_dtype),
        b2d=bias.astype(jnp.float32).reshape(1, E),
        compute_dtype=compute_dtype,
    )


# ------------------------------ wrapper ------------------------------------ #

def encoder_image_weight_norm_precomp(images, weight_v, weight_g, bias,
                                      no_imgnorm=False,
                                      compute_dtype=jnp.bfloat16,
                                      out_dtype=jnp.float32,
                                      block_b=None, block_k=None,
                                      params=None):
    """images: [B, img_dim]; weight_v: [embed_size, img_dim]; weight_g: scalar;
    bias: [embed_size].  Returns [B, embed_size]."""
    B, D = images.shape
    E, Dv = weight_v.shape
    assert D == Dv and bias.shape == (E,)

    if params is None:
        params = precompute_encoder_params(weight_v, weight_g, bias, compute_dtype)
    compute_dtype = params["compute_dtype"]
    scale2d, v, b2d = params["scale2d"], params["v"], params["b2d"]

    in_isz = jnp.dtype(compute_dtype).itemsize
    out_isz = jnp.dtype(out_dtype).itemsize

    # Pad to lane/sublane-friendly sizes; zero padding is exact for this op.
    Ep = _round_up(E, 128)
    Dp = _round_up(D, 128)

    vmem_cap = _vmem_capacity_bytes()
    num_cores = _num_tensorcores()
    block_b, block_k, Bp, Dp = _choose_blocks(
        B, Dp, Ep, in_isz, out_isz, vmem_cap, num_cores, block_b, block_k)

    x = images.astype(compute_dtype)
    if Bp != B or Dp != D:
        x = jnp.pad(x, ((0, Bp - B), (0, Dp - D)))
    if Ep != E or Dp != D:
        v = jnp.pad(v, ((0, Ep - E), (0, Dp - D)))
    if Ep != E:
        b2d = jnp.pad(b2d, ((0, 0), (0, Ep - E)))

    nk = Dp // block_k
    gb = Bp // block_b
    vmem_limit = int(min(vmem_cap,
                         max(_vmem_footprint(block_b, block_k, Dp, Ep, in_isz, out_isz)
                             + (4 << 20), 32 << 20)))

    if nk == 1:
        kernel = _make_single_kernel(bool(no_imgnorm))
        grid = (gb,)
        in_specs = [
            pl.BlockSpec(memory_space=pltpu.MemorySpace.SMEM),          # scale (1,1)
            pl.BlockSpec((block_b, block_k), lambda i: (i, 0)),         # images
            pl.BlockSpec((Ep, block_k), lambda i: (0, 0)),              # weight_v
            pl.BlockSpec((1, Ep), lambda i: (0, 0)),                    # bias
        ]
        out_specs = pl.BlockSpec((block_b, Ep), lambda i: (i, 0))
        scratch = []
        dims = ("parallel",)
    else:
        kernel = _make_ktiled_kernel(bool(no_imgnorm))
        grid = (gb, nk)
        in_specs = [
            pl.BlockSpec(memory_space=pltpu.MemorySpace.SMEM),          # scale (1,1)
            pl.BlockSpec((block_b, block_k), lambda i, k: (i, k)),      # images
            pl.BlockSpec((Ep, block_k), lambda i, k: (0, k)),           # weight_v
            pl.BlockSpec((1, Ep), lambda i, k: (0, 0)),                 # bias
        ]
        out_specs = pl.BlockSpec((block_b, Ep), lambda i, k: (i, 0))
        scratch = [pltpu.VMEM((block_b, Ep), jnp.float32)]
        dims = ("parallel", "arbitrary")

    out = pl.pallas_call(
        kernel,
        out_shape=jax.ShapeDtypeStruct((Bp, Ep), out_dtype),
        grid_spec=pltpu.PrefetchScalarGridSpec(
            num_scalar_prefetch=0,
            grid=grid,
            in_specs=in_specs,
            out_specs=out_specs,
            scratch_shapes=scratch,
        ),
        compiler_params=pltpu.CompilerParams(
            dimension_semantics=dims,
            vmem_limit_bytes=vmem_limit),
    )(scale2d, x, v, b2d)

    if Bp != B or Ep != E:
        out = out[:B, :E]
    return out


# ------------------------------ reference ---------------------------------- #

def _reference(images, weight_v, weight_g, bias, no_imgnorm=False):
    v_norm = jnp.sqrt(jnp.sum(weight_v * weight_v))
    w = weight_v * (weight_g / v_norm)
    feats = images @ w.T + bias[None, :]
    if no_imgnorm:
        return feats
    nrm = jnp.sqrt(jnp.sum(feats * feats, axis=-1, keepdims=True)) + 1e-8
    return feats / nrm


# TODO(synk): load_state_dict is framework parameter bookkeeping with no kernel
# equivalent; only the forward pass is implemented here.

if __name__ == "__main__":
    # Small, aligned shapes: precomputed image features -> joint embedding.
    B, img_dim, embed_size = 256, 256, 128

    key = jax.random.PRNGKey(0)
    k_img, k_v, k_b = jax.random.split(key, 3)

    images = jax.random.normal(k_img, (B, img_dim), dtype=jnp.float32)
    bound = 1.0 / (img_dim ** 0.5)
    weight_v = jax.random.uniform(k_v, (embed_size, img_dim),
                                  minval=-bound, maxval=bound, dtype=jnp.float32)
    bias = jax.random.uniform(k_b, (embed_size,),
                              minval=-bound, maxval=bound, dtype=jnp.float32)
    weight_g = 1.37 * jnp.sqrt(jnp.sum(weight_v * weight_v))

    ref = _reference(images, weight_v, weight_g, bias)
    ref_noimg = _reference(images, weight_v, weight_g, bias, no_imgnorm=True)

    # 1) default path: bf16 MXU operands, f32 accumulation + f32 epilogue
    out = jax.block_until_ready(
        encoder_image_weight_norm_precomp(images, weight_v, weight_g, bias))
    assert out.shape == (B, embed_size)
    assert jnp.allclose(out, ref, atol=3e-2, rtol=3e-2), "mismatch (bf16 default)"

    # 2) f32 path, strict tolerance (weight-resident single-K kernel)
    out32 = jax.block_until_ready(encoder_image_weight_norm_precomp(
        images, weight_v, weight_g, bias, compute_dtype=jnp.float32))
    assert jnp.allclose(out32, ref, atol=1e-4, rtol=1e-4), "mismatch (f32)"

    # 3) forced K-tiling: exercises the accumulator / pl.when epilogue kernel
    out_kt = jax.block_until_ready(encoder_image_weight_norm_precomp(
        images, weight_v, weight_g, bias, compute_dtype=jnp.float32,
        block_b=128, block_k=128))
    assert jnp.allclose(out_kt, ref, atol=1e-4, rtol=1e-4), "mismatch (K-tiled)"

    # 4) no_imgnorm=True branch (skip l2norm epilogue)
    out_ni = jax.block_until_ready(encoder_image_weight_norm_precomp(
        images, weight_v, weight_g, bias, compute_dtype=jnp.float32,
        no_imgnorm=True))
    assert jnp.allclose(out_ni, ref_noimg, atol=1e-4, rtol=1e-4), "mismatch (no_imgnorm)"

    # 5) precomputed constant params reused across calls (hoisted cast + scale)
    prm = precompute_encoder_params(weight_v, weight_g, bias,
                                    compute_dtype=jnp.float32)
    out_p = jax.block_until_ready(encoder_image_weight_norm_precomp(
        images, weight_v, weight_g, bias, params=prm))
    assert jnp.allclose(out_p, ref, atol=1e-4, rtol=1e-4), "mismatch (precomputed params)"

    # 6) ragged / unaligned shapes exercise the zero-padding path
    Br, Dr, Er = 200, 200, 96
    kr1, kr2, kr3 = jax.random.split(jax.random.PRNGKey(1), 3)
    img_r = jax.random.normal(kr1, (Br, Dr), dtype=jnp.float32)
    v_r = jax.random.uniform(kr2, (Er, Dr), minval=-0.1, maxval=0.1, dtype=jnp.float32)
    b_r = jax.random.uniform(kr3, (Er,), minval=-0.1, maxval=0.1, dtype=jnp.float32)
    g_r = 0.8 * jnp.sqrt(jnp.sum(v_r * v_r))
    out_r = jax.block_until_ready(encoder_image_weight_norm_precomp(
        img_r, v_r, g_r, b_r, compute_dtype=jnp.float32))
    assert out_r.shape == (Br, Er)
    assert jnp.allclose(out_r, _reference(img_r, v_r, g_r, b_r),
                        atol=1e-4, rtol=1e-4), "mismatch (ragged)"

    print("KERNEL_OK")
</pallas_src>

<mosaic_0001>
module attributes {stable_mosaic.version = 11 : i64} {
  func.func @kernel(%arg0: i32, %arg1: memref<1x1xf32, #tpu.memory_space<smem>>, %arg2: memref<256x256xbf16, #tpu.memory_space<vmem>>, %arg3: memref<128x256xbf16, #tpu.memory_space<vmem>>, %arg4: memref<1x128xf32, #tpu.memory_space<vmem>>, %arg5: memref<256x128xf32, #tpu.memory_space<vmem>>) attributes {dimension_semantics = [#tpu.dimension_semantics<parallel>], iteration_bounds = array<i64: 1>, scalar_prefetch = 0 : i64, scratch_operands = 0 : i64, tpu.core_type = #tpu.core_type<tc>, window_params = [{transform_indices = @transform_0, window_bounds = array<i64: 1, 1>}, {transform_indices = @transform_1, window_bounds = array<i64: 256, 256>}, {pipeline_mode = #tpu.pipeline_mode<synchronous>, transform_indices = @transform_2, window_bounds = array<i64: 128, 256>}, {pipeline_mode = #tpu.pipeline_mode<synchronous>, transform_indices = @transform_3, window_bounds = array<i64: 1, 128>}, {transform_indices = @transform_4, window_bounds = array<i64: 256, 128>}]} {
    %c0 = arith.constant 0 : index
    %c0_0 = arith.constant 0 : index
    %0 = vector.load %arg2[%c0, %c0_0] : memref<256x256xbf16, #tpu.memory_space<vmem>>, vector<256x256xbf16>
    %c0_1 = arith.constant 0 : index
    %c0_2 = arith.constant 0 : index
    %1 = vector.load %arg3[%c0_1, %c0_2] : memref<128x256xbf16, #tpu.memory_space<vmem>>, vector<128x256xbf16>
    %cst = arith.constant dense<0.000000e+00> : vector<256x128xf32>
    %2 = tpu.matmul %0, %1, %cst {dimension_numbers = #tpu.dot_dimension_numbers<[1], [1], [0], [0], [0, 0, 1, 0], [], []>} : vector<256x256xbf16>, vector<128x256xbf16>, vector<256x128xf32> -> vector<256x128xf32>
    %c0_3 = arith.constant 0 : index
    %c0_4 = arith.constant 0 : index
    %3 = memref.load %arg1[%c0_3, %c0_4] : memref<1x1xf32, #tpu.memory_space<smem>>
    %4 = vector.broadcast %3 : f32 to vector<256x128xf32>
    %5 = arith.mulf %2, %4 : vector<256x128xf32>
    %c0_5 = arith.constant 0 : index
    %c0_6 = arith.constant 0 : index
    %6 = vector.load %arg4[%c0_5, %c0_6] : memref<1x128xf32, #tpu.memory_space<vmem>>, vector<1x128xf32>
    %7 = vector.broadcast %6 : vector<1x128xf32> to vector<256x128xf32>
    %8 = arith.addf %5, %7 : vector<256x128xf32>
    %9 = arith.mulf %8, %8 : vector<256x128xf32>
    %cst_7 = arith.constant dense<0.000000e+00> : vector<256xf32>
    %10 = vector.multi_reduction <add>, %9, %cst_7 [1] : vector<256x128xf32> to vector<256xf32>
    %11 = vector.shape_cast %10 : vector<256xf32> to vector<256x1xf32>
    %12 = math.sqrt %11 : vector<256x1xf32>
    %cst_8 = arith.constant 9.99999993E-9 : f32
    %13 = vector.broadcast %cst_8 : f32 to vector<256x1xf32>
    %14 = arith.addf %12, %13 : vector<256x1xf32>
    %15 = tpu.reciprocal %14 : vector<256x1xf32> -> vector<256x1xf32>
    %16 = vector.broadcast %15 : vector<256x1xf32> to vector<256x128xf32>
    %17 = arith.mulf %8, %16 : vector<256x128xf32>
    %c0_9 = arith.constant 0 : index
    %c0_10 = arith.constant 0 : index
    %18 = vector.load %arg5[%c0_9, %c0_10] : memref<256x128xf32, #tpu.memory_space<vmem>>, vector<256x128xf32>
    tpu.vector_store %arg5[%c0_9, %c0_10], %17 {strides = array<i32>} : memref<256x128xf32, #tpu.memory_space<vmem>>, vector<256x128xf32>,
    return
  }
  func.func @transform_0(%arg0: i32) -> (i32, i32) {
    %c0_i32 = arith.constant 0 : i32
    %c0_i32_0 = arith.constant 0 : i32
    %c0_i32_1 = arith.constant 0 : i32
    return %c0_i32, %c0_i32_0 : i32, i32
  }
  func.func @transform_1(%arg0: i32) -> (i32, i32) {
    %c0_i32 = arith.constant 0 : i32
    %c0_i32_0 = arith.constant 0 : i32
    return %arg0, %c0_i32 : i32, i32
  }
  func.func @transform_2(%arg0: i32) -> (i32, i32) {
    %c0_i32 = arith.constant 0 : i32
    %c0_i32_0 = arith.constant 0 : i32
    %c0_i32_1 = arith.constant 0 : i32
    return %c0_i32, %c0_i32_0 : i32, i32
  }
  func.func @transform_3(%arg0: i32) -> (i32, i32) {
    %c0_i32 = arith.constant 0 : i32
    %c0_i32_0 = arith.constant 0 : i32
    %c0_i32_1 = arith.constant 0 : i32
    return %c0_i32, %c0_i32_0 : i32, i32
  }
  func.func @transform_4(%arg0: i32) -> (i32, i32) {
    %c0_i32 = arith.constant 0 : i32
    %c0_i32_0 = arith.constant 0 : i32
    return %arg0, %c0_i32 : i32, i32
  }
}

</mosaic_0001>

<llo_original>
// kernel: tpu_custom_call.1
$region0: #{tpu_custom_call.1}
  #allocation0 [shape = 'u32[]', space=smem, size = 0x4, offset = 0x4, fixed_abs, tag = 'smem constant byte address 0x4 - core index']
  #allocation1 [shape = 'u32[144,128]{1,0:T(1,128)}', space=vmem, size = 0x12000, scoped, tag = 'internal scratch']
  #allocation2 [shape = 'f32[1,1]{1,0:T(1,128)S(6)}', space=smem, size = 0x200, scoped, tag = 'scoped memory for tpu_custom_call.1']
  %s0 = inlined_call_operand.<no memory space> [shape: f32[1,1], index: 0, kind: input, shape index: {}]
  %s1 = inlined_call_operand.hbm [shape: bf16[256,256], index: 1, kind: input, shape index: {}]
  %s2 = inlined_call_operand.hbm [shape: bf16[128,256], index: 2, kind: input, shape index: {}]
  %s3 = inlined_call_operand.vmem [shape: f32[1,128], index: 3, kind: input, shape index: {}]
  %s4 = inlined_call_operand.hbm [shape: f32[256,128], index: 4, kind: output, shape index: {}]
  %s5 = sld [smem:[#allocation0]]
  $region34: #{tpu_custom_call.1} parent=0
    _
  %s7 = ssub.s32 1, %s5
  %s8 = scalar_select 0, %s7, %s5
  %9 = sst [smem:[#allocation2]] %s0
  $region1: #{tpu_custom_call.1} parent=0
    #allocation3 [shape = 'u8[131072]{0}', space=vmem, size = 0x20000, scoped, tag = 'input window, operand 1, single buffered']
    #allocation4 [shape = 's32[1]{0}', space=sflag, size = 0x4, scoped, tag = 'scoped memory for tpu_custom_call.1']
    #allocation5 [shape = 's32[1]{0}', space=sflag, size = 0x4, scoped, tag = 'scoped memory for tpu_custom_call.1']
    #allocation6 [shape = 'u8[65536]{0}', space=vmem, size = 0x10000, scoped, tag = 'input window, operand 2, single buffered']
    #allocation7 [shape = 's32[1]{0}', space=sflag, size = 0x4, scoped, tag = 'scoped memory for tpu_custom_call.1']
    #allocation8 [shape = 'u8[131072]{0}', space=vmem, size = 0x20000, scoped, tag = 'output window, operand 0, single buffered']
    %10 = vsyncpa [#allocation4], 0
    %11 = vsyncpa [#allocation7], 0
    %12 = vsyncpa [#allocation5], 0
    // Predicated region
    $region2: #{tpu_custom_call.1} parent=1 // pred_check
      _
    $region3: #{tpu_custom_call.1} parent=1 // pred_check_branch
      %14 = sbr.rel (0) target = $region5
    $region4: #{tpu_custom_call.1} parent=1 // pred_region
      _
    $region5: #{tpu_custom_call.1} parent=1 // pred_fallthru
      _
    // Predicated region
    $region6: #{tpu_custom_call.1} parent=1 // pred_check
      _
    $region7: #{tpu_custom_call.1} parent=1 // pred_check_branch
      %16 = sbr.rel (0) target = $region9
    $region8: #{tpu_custom_call.1} parent=1 // pred_region
      %s18 = ssub.s32 4096, 4096
      %19 = vsyncadd [#allocation4], %s18
      %s20 = sshll.u32 [#allocation3], 4
      %s21 = int_to_ptr.vmem [resolvable:$true] %s20
      %26 = dma.hbm_to_vmem [thread:$0]  %s1, 4096, %s21, [#allocation4], 128, 128, 8
    $region9: #{tpu_custom_call.1} parent=1 // pred_fallthru
      _
    // Predicated region
    $region10: #{tpu_custom_call.1} parent=1 // pred_check
      _
    $region11: #{tpu_custom_call.1} parent=1 // pred_check_branch
      %28 = sbr.rel (0) target = $region13
    $region12: #{tpu_custom_call.1} parent=1 // pred_region
      %s30 = ssub.s32 2048, 2048
      %31 = vsyncadd [#allocation7], %s30
      %s32 = sshll.u32 [#allocation6], 4
      %s33 = int_to_ptr.vmem [resolvable:$true] %s32
      %38 = dma.hbm_to_vmem [thread:$0]  %s2, 2048, %s33, [#allocation7], 128, 128, 8
    $region13: #{tpu_custom_call.1} parent=1 // pred_fallthru
      _
    // Predicated region
    $region14: #{tpu_custom_call.1} parent=1 // pred_check
      _
    $region15: #{tpu_custom_call.1} parent=1 // pred_check_branch
      %40 = sbr.rel (0) target = $region17
    $region16: #{tpu_custom_call.1} parent=1 // pred_region
      _
    $region17: #{tpu_custom_call.1} parent=1 // pred_fallthru
      _
    // Predicated region
    $region18: #{tpu_custom_call.1} parent=1 // pred_check
      _
    $region19: #{tpu_custom_call.1} parent=1 // pred_check_branch
      %42 = sbr.rel (0) target = $region21
    $region20: #{tpu_custom_call.1} parent=1 // pred_region
      %43 = dma.done [#allocation4], 4096
    $region21: #{tpu_custom_call.1} parent=1 // pred_fallthru
      _
    // Predicated region
    $region22: #{tpu_custom_call.1} parent=1 // pred_check
      _
    $region23: #{tpu_custom_call.1} parent=1 // pred_check_branch
      %45 = sbr.rel (0) target = $region25
    $region24: #{tpu_custom_call.1} parent=1 // pred_region
      %46 = dma.done [#allocation7], 2048
    $region25: #{tpu_custom_call.1} parent=1 // pred_fallthru
      _
    %v48 = vld [vmem:[#allocation3] sm:$0xff]
    %v49 = vld [vmem:[#allocation3 + $0x8] sm:$0xff]
    %v50 = vld [vmem:[#allocation3 + $0x10] sm:$0xff]
    %v51 = vld [vmem:[#allocation3 + $0x18] sm:$0xff]
    %v52 = vld [vmem:[#allocation3 + $0x20] sm:$0xff]
    %v53 = vld [vmem:[#allocation3 + $0x28] sm:$0xff]
    %v54 = vld [vmem:[#allocation3 + $0x30] sm:$0xff]
    %v55 = vld [vmem:[#allocation3 + $0x38] sm:$0xff]
    %v56 = vld [vmem:[#allocation3 + $0x40] sm:$0xff]
    %v57 = vld [vmem:[#allocation3 + $0x48] sm:$0xff]
    %v58 = vld [vmem:[#allocation3 + $0x50] sm:$0xff]
    %v59 = vld [vmem:[#allocation3 + $0x58] sm:$0xff]
    %v60 = vld [vmem:[#allocation3 + $0x60] sm:$0xff]
    %v61 = vld [vmem:[#allocation3 + $0x68] sm:$0xff]
    %v62 = vld [vmem:[#allocation3 + $0x70] sm:$0xff]
    %v63 = vld [vmem:[#allocation3 + $0x78] sm:$0xff]
    %v64 = vld [vmem:[#allocation3 + $0x80] sm:$0xff]
    %v65 = vld [vmem:[#allocation3 + $0x88] sm:$0xff]
    %v66 = vld [vmem:[#allocation3 + $0x90] sm:$0xff]
    %v67 = vld [vmem:[#allocation3 + $0x98] sm:$0xff]
    %v68 = vld [vmem:[#allocation3 + $0xa0] sm:$0xff]
    %v69 = vld [vmem:[#allocation3 + $0xa8] sm:$0xff]
    %v70 = vld [vmem:[#allocation3 + $0xb0] sm:$0xff]
    %v71 = vld [vmem:[#allocation3 + $0xb8] sm:$0xff]
    %v72 = vld [vmem:[#allocation3 + $0xc0] sm:$0xff]
    %v73 = vld [vmem:[#allocation3 + $0xc8] sm:$0xff]
    %v74 = vld [vmem:[#allocation3 + $0xd0] sm:$0xff]
    %v75 = vld [vmem:[#allocation3 + $0xd8] sm:$0xff]
    %v76 = vld [vmem:[#allocation3 + $0xe0] sm:$0xff]
    %v77 = vld [vmem:[#allocation3 + $0xe8] sm:$0xff]
    %v78 = vld [vmem:[#allocation3 + $0xf0] sm:$0xff]
    %v79 = vld [vmem:[#allocation3 + $0xf8] sm:$0xff]
    %v80 = vld [vmem:[#allocation6] sm:$0xff]
    %v81 = vld [vmem:[#allocation6 + $0x8] sm:$0xff]
    %v82 = vld [vmem:[#allocation6 + $0x10] sm:$0xff]
    %v83 = vld [vmem:[#allocation6 + $0x18] sm:$0xff]
    %v84 = vld [vmem:[#allocation6 + $0x20] sm:$0xff]
    %v85 = vld [vmem:[#allocation6 + $0x28] sm:$0xff]
    %v86 = vld [vmem:[#allocation6 + $0x30] sm:$0xff]
    %v87 = vld [vmem:[#allocation6 + $0x38] sm:$0xff]
    %v88 = vld [vmem:[#allocation6 + $0x40] sm:$0xff]
    %v89 = vld [vmem:[#allocation6 + $0x48] sm:$0xff]
    %v90 = vld [vmem:[#allocation6 + $0x50] sm:$0xff]
    %v91 = vld [vmem:[#allocation6 + $0x58] sm:$0xff]
    %v92 = vld [vmem:[#allocation6 + $0x60] sm:$0xff]
    %v93 = vld [vmem:[#allocation6 + $0x68] sm:$0xff]
    %v94 = vld [vmem:[#allocation6 + $0x70] sm:$0xff]
    %v95 = vld [vmem:[#allocation6 + $0x78] sm:$0xff]
    %v128 = vunpack.c.l.b16 %v48
    %v129 = vunpack.c.h.b16 %v48
    %v130 = vunpack.c.l.b16 %v49
    %v131 = vunpack.c.h.b16 %v49
    %v132 = vunpack.c.l.b16 %v50
    %v133 = vunpack.c.h.b16 %v50
    %v134 = vunpack.c.l.b16 %v51
    %v135 = vunpack.c.h.b16 %v51
    %v136 = vunpack.c.l.b16 %v52
    %v137 = vunpack.c.h.b16 %v52
    %v138 = vunpack.c.l.b16 %v53
    %v139 = vunpack.c.h.b16 %v53
    %v140 = vunpack.c.l.b16 %v54
    %v141 = vunpack.c.h.b16 %v54
    %v142 = vunpack.c.l.b16 %v55
    %v143 = vunpack.c.h.b16 %v55
    %v144 = vunpack.c.l.b16 %v56
    %v145 = vunpack.c.h.b16 %v56
    %v146 = vunpack.c.l.b16 %v57
    %v147 = vunpack.c.h.b16 %v57
    %v148 = vunpack.c.l.b16 %v58
    %v149 = vunpack.c.h.b16 %v58
    %v150 = vunpack.c.l.b16 %v59
    %v151 = vunpack.c.h.b16 %v59
    %v152 = vunpack.c.l.b16 %v60
    %v153 = vunpack.c.h.b16 %v60
    %v154 = vunpack.c.l.b16 %v61
    %v155 = vunpack.c.h.b16 %v61
    %v156 = vunpack.c.l.b16 %v62
    %v157 = vunpack.c.h.b16 %v62
    %v158 = vunpack.c.l.b16 %v63
    %v159 = vunpack.c.h.b16 %v63
    %v160 = vunpack.c.l.b16 %v64
    %v161 = vunpack.c.h.b16 %v64
    %v162 = vunpack.c.l.b16 %v65
    %v163 = vunpack.c.h.b16 %v65
    %v164 = vunpack.c.l.b16 %v66
    %v165 = vunpack.c.h.b16 %v66
    %v166 = vunpack.c.l.b16 %v67
    %v167 = vunpack.c.h.b16 %v67
    %v168 = vunpack.c.l.b16 %v68
    %v169 = vunpack.c.h.b16 %v68
    %v170 = vunpack.c.l.b16 %v69
    %v171 = vunpack.c.h.b16 %v69
    %v172 = vunpack.c.l.b16 %v70
    %v173 = vunpack.c.h.b16 %v70
    %v174 = vunpack.c.l.b16 %v71
    %v175 = vunpack.c.h.b16 %v71
    %v176 = vunpack.c.l.b16 %v72
    %v177 = vunpack.c.h.b16 %v72
    %v178 = vunpack.c.l.b16 %v73
    %v179 = vunpack.c.h.b16 %v73
    %v180 = vunpack.c.l.b16 %v74
    %v181 = vunpack.c.h.b16 %v74
    %v182 = vunpack.c.l.b16 %v75
    %v183 = vunpack.c.h.b16 %v75
    %v184 = vunpack.c.l.b16 %v76
    %v185 = vunpack.c.h.b16 %v76
    %v186 = vunpack.c.l.b16 %v77
    %v187 = vunpack.c.h.b16 %v77
    %v188 = vunpack.c.l.b16 %v78
    %v189 = vunpack.c.h.b16 %v78
    %v190 = vunpack.c.l.b16 %v79
    %v191 = vunpack.c.h.b16 %v79
    %v192 = vpack.c.b16 %v130, %v128
    %v193 = vpack.c.b16 %v131, %v129
    %v194 = vpack.c.b16 %v134, %v132
    %v195 = vpack.c.b16 %v135, %v133
    %v196 = vpack.c.b16 %v138, %v136
    %v197 = vpack.c.b16 %v139, %v137
    %v198 = vpack.c.b16 %v142, %v140
    %v199 = vpack.c.b16 %v143, %v141
    %v200 = vpack.c.b16 %v146, %v144
    %v201 = vpack.c.b16 %v147, %v145
    %v202 = vpack.c.b16 %v150, %v148
    %v203 = vpack.c.b16 %v151, %v149
    %v204 = vpack.c.b16 %v154, %v152
    %v205 = vpack.c.b16 %v155, %v153
    %v206 = vpack.c.b16 %v158, %v156
    %v207 = vpack.c.b16 %v159, %v157
    %v208 = vpack.c.b16 %v162, %v160
    %v209 = vpack.c.b16 %v163, %v161
    %v210 = vpack.c.b16 %v166, %v164
    %v211 = vpack.c.b16 %v167, %v165
    %v212 = vpack.c.b16 %v170, %v168
    %v213 = vpack.c.b16 %v171, %v169
    %v214 = vpack.c.b16 %v174, %v172
    %v215 = vpack.c.b16 %v175, %v173
    %v216 = vpack.c.b16 %v178, %v176
    %v217 = vpack.c.b16 %v179, %v177
    %v218 = vpack.c.b16 %v182, %v180
    %v219 = vpack.c.b16 %v183, %v181
    %v220 = vpack.c.b16 %v186, %v184
    %v221 = vpack.c.b16 %v187, %v185
    %v222 = vpack.c.b16 %v190, %v188
    %v223 = vpack.c.b16 %v191, %v189
    %v272 = vunpack.c.l.b16 %v80
    %v273 = vunpack.c.h.b16 %v80
    %v274 = vunpack.c.l.b16 %v81
    %v275 = vunpack.c.h.b16 %v81
    %v276 = vunpack.c.l.b16 %v82
    %v277 = vunpack.c.h.b16 %v82
    %v278 = vunpack.c.l.b16 %v83
    %v279 = vunpack.c.h.b16 %v83
    %v280 = vunpack.c.l.b16 %v84
    %v281 = vunpack.c.h.b16 %v84
    %v282 = vunpack.c.l.b16 %v85
    %v283 = vunpack.c.h.b16 %v85
    %v284 = vunpack.c.l.b16 %v86
    %v285 = vunpack.c.h.b16 %v86
    %v286 = vunpack.c.l.b16 %v87
    %v287 = vunpack.c.h.b16 %v87
    %v288 = vunpack.c.l.b16 %v88
    %v289 = vunpack.c.h.b16 %v88
    %v290 = vunpack.c.l.b16 %v89
    %v291 = vunpack.c.h.b16 %v89
    %v292 = vunpack.c.l.b16 %v90
    %v293 = vunpack.c.h.b16 %v90
    %v294 = vunpack.c.l.b16 %v91
    %v295 = vunpack.c.h.b16 %v91
    %v296 = vunpack.c.l.b16 %v92
    %v297 = vunpack.c.h.b16 %v92
    %v298 = vunpack.c.l.b16 %v93
    %v299 = vunpack.c.h.b16 %v93
    %v300 = vunpack.c.l.b16 %v94
    %v301 = vunpack.c.h.b16 %v94
    %v302 = vunpack.c.l.b16 %v95
    %v303 = vunpack.c.h.b16 %v95
    %v304 = vpack.c.b16 %v274, %v272
    %v305 = vpack.c.b16 %v275, %v273
    %v306 = vpack.c.b16 %v278, %v276
    %v307 = vpack.c.b16 %v279, %v277
    %v308 = vpack.c.b16 %v282, %v280
    %v309 = vpack.c.b16 %v283, %v281
    %v310 = vpack.c.b16 %v286, %v284
    %v311 = vpack.c.b16 %v287, %v285
    %v312 = vpack.c.b16 %v290, %v288
    %v313 = vpack.c.b16 %v291, %v289
    %v314 = vpack.c.b16 %v294, %v292
    %v315 = vpack.c.b16 %v295, %v293
    %v316 = vpack.c.b16 %v298, %v296
    %v317 = vpack.c.b16 %v299, %v297
    %v318 = vpack.c.b16 %v302, %v300
    %v319 = vpack.c.b16 %v303, %v301
    %336 = vmatprep.subr.bf16.mxu0 %v305
    %337 = vmatpush1.bf16.xpose.msra.mxu0 %v304
    %338 = vmatprep.subr.bf16.mxu0 %v307
    %339 = vmatpush1.bf16.xpose.msra.mxu0 %v306
    %340 = vmatprep.subr.bf16.mxu0 %v309
    %341 = vmatpush1.bf16.xpose.msra.mxu0 %v308
    %342 = vmatprep.subr.bf16.mxu0 %v311
    %343 = vmatpush1.bf16.xpose.msra.mxu0 %v310
    %344 = vmatprep.subr.bf16.mxu0 %v313
    %345 = vmatpush1.bf16.xpose.msra.mxu0 %v312
    %346 = vmatprep.subr.bf16.mxu0 %v315
    %347 = vmatpush1.bf16.xpose.msra.mxu0 %v314
    %348 = vmatprep.subr.bf16.mxu0 %v317
    %349 = vmatpush1.bf16.xpose.msra.mxu0 %v316
    %350 = vmatprep.subr.bf16.mxu0 %v319
    %351 = vmatpush1.bf16.xpose.msra.mxu0 %v318
    %352 = vmatprep.subr.bf16.mxu0 0
    %353 = vmatpush1.bf16.xpose.msra.mxu0 0
    %354 = vmatprep.subr.bf16.mxu0 0
    %355 = vmatpush1.bf16.xpose.msra.mxu0 0
    %356 = vmatprep.subr.bf16.mxu0 0
    %357 = vmatpush1.bf16.xpose.msra.mxu0 0
    %358 = vmatprep.subr.bf16.mxu0 0
    %359 = vmatpush1.bf16.xpose.msra.mxu0 0
    %360 = vmatprep.subr.bf16.mxu0 0
    %361 = vmatpush1.bf16.xpose.msra.mxu0 0
    %362 = vmatprep.subr.bf16.mxu0 0
    %363 = vmatpush1.bf16.xpose.msra.mxu0 0
    %364 = vmatprep.subr.bf16.mxu0 0
    %365 = vmatpush1.bf16.xpose.msra.mxu0 0
    %366 = vmatprep.subr.bf16.mxu0 0
    %367 = vmatpush1.bf16.xpose.msra.mxu0 0
    %368 = vmatprep.mubr.bf16.mxu0 %v193
    %369 = vmatmul.mubr.bf16.gmra.mrb[0].mxu0 %v192
    %v370 = vpop.f32.mrb[0].mxu0
    %v371 = vadd.f32 0.0, %v370
    %v372 = vpop.f32.mrb[0].mxu0
    %v373 = vpop.f32.mrb[0].mxu0
    %v374 = vadd.f32 0.0, %v373
    %v375 = vpop.f32.mrb[0].mxu0
    %376 = vmatprep.mubr.bf16.mxu0 %v195
    %377 = vmatmul.mubr.bf16.gmra.mrb[0].mxu0 %v194
    %v378 = vpop.f32.mrb[0].mxu0
    %v379 = vadd.f32 0.0, %v378
    %v380 = vpop.f32.mrb[0].mxu0
    %v381 = vpop.f32.mrb[0].mxu0
    %v382 = vadd.f32 0.0, %v381
    %v383 = vpop.f32.mrb[0].mxu0
    %384 = vmatprep.mubr.bf16.mxu0 %v197
    %385 = vmatmul.mubr.bf16.gmra.mrb[0].mxu0 %v196
    %v386 = vpop.f32.mrb[0].mxu0
    %v387 = vadd.f32 0.0, %v386
    %v388 = vpop.f32.mrb[0].mxu0
    %v389 = vpop.f32.mrb[0].mxu0
    %v390 = vadd.f32 0.0, %v389
    %v391 = vpop.f32.mrb[0].mxu0
    %392 = vmatprep.mubr.bf16.mxu0 %v199
    %393 = vmatmul.mubr.bf16.gmra.mrb[0].mxu0 %v198
    %v394 = vpop.f32.mrb[0].mxu0
    %v395 = vadd.f32 0.0, %v394
    %v396 = vpop.f32.mrb[0].mxu0
    %v397 = vpop.f32.mrb[0].mxu0
    %v398 = vadd.f32 0.0, %v397
    %v399 = vpop.f32.mrb[0].mxu0
    %400 = vmatprep.mubr.bf16.mxu0 %v201
    %401 = vmatmul.mubr.bf16.gmra.mrb[0].mxu0 %v200
    %v402 = vpop.f32.mrb[0].mxu0
    %v403 = vadd.f32 0.0, %v402
    %v404 = vpop.f32.mrb[0].mxu0
    %v405 = vpop.f32.mrb[0].mxu0
    %v406 = vadd.f32 0.0, %v405
    %v407 = vpop.f32.mrb[0].mxu0
    %408 = vmatprep.mubr.bf16.mxu0 %v203
    %409 = vmatmul.mubr.bf16.gmra.mrb[0].mxu0 %v202
    %v410 = vpop.f32.mrb[0].mxu0
    %v411 = vadd.f32 0.0, %v410
    %v412 = vpop.f32.mrb[0].mxu0
    %v413 = vpop.f32.mrb[0].mxu0
    %v414 = vadd.f32 0.0, %v413
    %v415 = vpop.f32.mrb[0].mxu0
    %416 = vmatprep.mubr.bf16.mxu0 %v205
    %417 = vmatmul.mubr.bf16.gmra.mrb[0].mxu0 %v204
    %v418 = vpop.f32.mrb[0].mxu0
    %v419 = vadd.f32 0.0, %v418
    %v420 = vpop.f32.mrb[0].mxu0
    %v421 = vpop.f32.mrb[0].mxu0
    %v422 = vadd.f32 0.0, %v421
    %v423 = vpop.f32.mrb[0].mxu0
    %424 = vmatprep.mubr.bf16.mxu0 %v207
    %425 = vmatmul.mubr.bf16.gmra.mrb[0].mxu0 %v206
    %v426 = vpop.f32.mrb[0].mxu0
    %v427 = vadd.f32 0.0, %v426
    %v428 = vpop.f32.mrb[0].mxu0
    %v429 = vpop.f32.mrb[0].mxu0
    %v430 = vadd.f32 0.0, %v429
    %v431 = vpop.f32.mrb[0].mxu0
    %432 = vmatprep.mubr.bf16.mxu0 %v209
    %433 = vmatmul.mubr.bf16.gmra.mrb[0].mxu0 %v208
    %v434 = vpop.f32.mrb[0].mxu0
    %v435 = vadd.f32 0.0, %v434
    %v436 = vpop.f32.mrb[0].mxu0
    %v437 = vpop.f32.mrb[0].mxu0
    %v438 = vadd.f32 0.0, %v437
    %v439 = vpop.f32.mrb[0].mxu0
    %440 = vmatprep.mubr.bf16.mxu0 %v211
    %441 = vmatmul.mubr.bf16.gmra.mrb[0].mxu0 %v210
    %v442 = vpop.f32.mrb[0].mxu0
    %v443 = vadd.f32 0.0, %v442
    %v444 = vpop.f32.mrb[0].mxu0
    %v445 = vpop.f32.mrb[0].mxu0
    %v446 = vadd.f32 0.0, %v445
    %v447 = vpop.f32.mrb[0].mxu0
    %448 = vmatprep.mubr.bf16.mxu0 %v213
    %449 = vmatmul.mubr.bf16.gmra.mrb[0].mxu0 %v212
    %v450 = vpop.f32.mrb[0].mxu0
    %v451 = vadd.f32 0.0, %v450
    %v452 = vpop.f32.mrb[0].mxu0
    %v453 = vpop.f32.mrb[0].mxu0
    %v454 = vadd.f32 0.0, %v453
    %v455 = vpop.f32.mrb[0].mxu0
    %456 = vmatprep.mubr.bf16.mxu0 %v215
    %457 = vmatmul.mubr.bf16.gmra.mrb[0].mxu0 %v214
    %v458 = vpop.f32.mrb[0].mxu0
    %v459 = vadd.f32 0.0, %v458
    %v460 = vpop.f32.mrb[0].mxu0
    %v461 = vpop.f32.mrb[0].mxu0
    %v462 = vadd.f32 0.0, %v461
    %v463 = vpop.f32.mrb[0].mxu0
    %464 = vmatprep.mubr.bf16.mxu0 %v217
    %465 = vmatmul.mubr.bf16.gmra.mrb[0].mxu0 %v216
    %v466 = vpop.f32.mrb[0].mxu0
    %v467 = vadd.f32 0.0, %v466
    %v468 = vpop.f32.mrb[0].mxu0
    %v469 = vpop.f32.mrb[0].mxu0
    %v470 = vadd.f32 0.0, %v469
    %v471 = vpop.f32.mrb[0].mxu0
    %472 = vmatprep.mubr.bf16.mxu0 %v219
    %473 = vmatmul.mubr.bf16.gmra.mrb[0].mxu0 %v218
    %v474 = vpop.f32.mrb[0].mxu0
    %v475 = vadd.f32 0.0, %v474
    %v476 = vpop.f32.mrb[0].mxu0
    %v477 = vpop.f32.mrb[0].mxu0
    %v478 = vadd.f32 0.0, %v477
    %v479 = vpop.f32.mrb[0].mxu0
    %480 = vmatprep.mubr.bf16.mxu0 %v221
    %481 = vmatmul.mubr.bf16.gmra.mrb[0].mxu0 %v220
    %v482 = vpop.f32.mrb[0].mxu0
    %v483 = vadd.f32 0.0, %v482
    %v484 = vpop.f32.mrb[0].mxu0
    %v485 = vpop.f32.mrb[0].mxu0
    %v486 = vadd.f32 0.0, %v485
    %v487 = vpop.f32.mrb[0].mxu0
    %488 = vmatprep.mubr.bf16.mxu0 %v223
    %489 = vmatmul.mubr.bf16.gmra.mrb[0].mxu0 %v222
    %v490 = vpop.f32.mrb[0].mxu0
    %v491 = vadd.f32 0.0, %v490
    %v492 = vpop.f32.mrb[0].mxu0
    %v493 = vpop.f32.mrb[0].mxu0
    %v494 = vadd.f32 0.0, %v493
    %v495 = vpop.f32.mrb[0].mxu0
    %496 = vdwg.mxu0
    %s497 = sld [smem:[#allocation2]]
    %v498 = vstv %s497
    %v499 = vmul.f32 %v371, %v498
    %v500 = vmul.f32 %v374, %v498
    %v501 = vmul.f32 %v379, %v498
    %v502 = vmul.f32 %v382, %v498
    %v503 = vmul.f32 %v387, %v498
    %v504 = vmul.f32 %v390, %v498
    %v505 = vmul.f32 %v395, %v498
    %v506 = vmul.f32 %v398, %v498
    %v507 = vmul.f32 %v403, %v498
    %v508 = vmul.f32 %v406, %v498
    %v509 = vmul.f32 %v411, %v498
    %v510 = vmul.f32 %v414, %v498
    %v511 = vmul.f32 %v419, %v498
    %v512 = vmul.f32 %v422, %v498
    %v513 = vmul.f32 %v427, %v498
    %v514 = vmul.f32 %v430, %v498
    %v515 = vmul.f32 %v435, %v498
    %v516 = vmul.f32 %v438, %v498
    %v517 = vmul.f32 %v443, %v498
    %v518 = vmul.f32 %v446, %v498
    %v519 = vmul.f32 %v451, %v498
    %v520 = vmul.f32 %v454, %v498
    %v521 = vmul.f32 %v459, %v498
    %v522 = vmul.f32 %v462, %v498
    %v523 = vmul.f32 %v467, %v498
    %v524 = vmul.f32 %v470, %v498
    %v525 = vmul.f32 %v475, %v498
    %v526 = vmul.f32 %v478, %v498
    %v527 = vmul.f32 %v483, %v498
    %v528 = vmul.f32 %v486, %v498
    %v529 = vmul.f32 %v491, %v498
    %v530 = vmul.f32 %v494, %v498
    %v531 = vld [vmem:[%s3] sm:$0x1]
    %v533 = vlaneseq
    %v534 = vshrl.u32 %v533, 7
    %v535 = vsub.s32 0, %v534
    %v536 = vrot.slane %v531, %v535
    %v538 = vadd.f32 %v499, %v536
    %v539 = vadd.f32 %v500, %v536
    %v540 = vadd.f32 %v501, %v536
    %v541 = vadd.f32 %v502, %v536
    %v542 = vadd.f32 %v503, %v536
    %v543 = vadd.f32 %v504, %v536
    %v544 = vadd.f32 %v505, %v536
    %v545 = vadd.f32 %v506, %v536
    %v546 = vadd.f32 %v507, %v536
    %v547 = vadd.f32 %v508, %v536
    %v548 = vadd.f32 %v509, %v536
    %v549 = vadd.f32 %v510, %v536
    %v550 = vadd.f32 %v511, %v536
    %v551 = vadd.f32 %v512, %v536
    %v552 = vadd.f32 %v513, %v536
    %v553 = vadd.f32 %v514, %v536
    %v554 = vadd.f32 %v515, %v536
    %v555 = vadd.f32 %v516, %v536
    %v556 = vadd.f32 %v517, %v536
    %v557 = vadd.f32 %v518, %v536
    %v558 = vadd.f32 %v519, %v536
    %v559 = vadd.f32 %v520, %v536
    %v560 = vadd.f32 %v521, %v536
    %v561 = vadd.f32 %v522, %v536
    %v562 = vadd.f32 %v523, %v536
    %v563 = vadd.f32 %v524, %v536
    %v564 = vadd.f32 %v525, %v536
    %v565 = vadd.f32 %v526, %v536
    %v566 = vadd.f32 %v527, %v536
    %v567 = vadd.f32 %v528, %v536
    %v568 = vadd.f32 %v529, %v536
    %v569 = vadd.f32 %v530, %v536
    %v570 = vmul.f32 %v538, %v538
    %v571 = vmul.f32 %v539, %v539
    %v572 = vmul.f32 %v540, %v540
    %v573 = vmul.f32 %v541, %v541
    %v574 = vmul.f32 %v542, %v542
    %v575 = vmul.f32 %v543, %v543
    %v576 = vmul.f32 %v544, %v544
    %v577 = vmul.f32 %v545, %v545
    %v578 = vmul.f32 %v546, %v546
    %v579 = vmul.f32 %v547, %v547
    %v580 = vmul.f32 %v548, %v548
    %v581 = vmul.f32 %v549, %v549
    %v582 = vmul.f32 %v550, %v550
    %v583 = vmul.f32 %v551, %v551
    %v584 = vmul.f32 %v552, %v552
    %v585 = vmul.f32 %v553, %v553
    %v586 = vmul.f32 %v554, %v554
    %v587 = vmul.f32 %v555, %v555
    %v588 = vmul.f32 %v556, %v556
    %v589 = vmul.f32 %v557, %v557
    %v590 = vmul.f32 %v558, %v558
    %v591 = vmul.f32 %v559, %v559
    %v592 = vmul.f32 %v560, %v560
    %v593 = vmul.f32 %v561, %v561
    %v594 = vmul.f32 %v562, %v562
    %v595 = vmul.f32 %v563, %v563
    %v596 = vmul.f32 %v564, %v564
    %v597 = vmul.f32 %v565, %v565
    %v598 = vmul.f32 %v566, %v566
    %v599 = vmul.f32 %v567, %v567
    %v600 = vmul.f32 %v568, %v568
    %v601 = vmul.f32 %v569, %v569
    %602 = vadd.xlane.f32.xlu0 %v570
    %v603 = vpop.xlane.xlu0 %602
    %604 = vadd.xlane.f32.xlu0 %v571
    %v605 = vpop.xlane.xlu0 %604
    %606 = vadd.xlane.f32.xlu0 %v572
    %v607 = vpop.xlane.xlu0 %606
    %608 = vadd.xlane.f32.xlu0 %v573
    %v609 = vpop.xlane.xlu0 %608
    %610 = vadd.xlane.f32.xlu0 %v574
    %v611 = vpop.xlane.xlu0 %610
    %612 = vadd.xlane.f32.xlu0 %v575
    %v613 = vpop.xlane.xlu0 %612
    %614 = vadd.xlane.f32.xlu0 %v576
    %v615 = vpop.xlane.xlu0 %614
    %616 = vadd.xlane.f32.xlu0 %v577
    %v617 = vpop.xlane.xlu0 %616
    %618 = vadd.xlane.f32.xlu0 %v578
    %v619 = vpop.xlane.xlu0 %618
    %620 = vadd.xlane.f32.xlu0 %v579
    %v621 = vpop.xlane.xlu0 %620
    %622 = vadd.xlane.f32.xlu0 %v580
    %v623 = vpop.xlane.xlu0 %622
    %624 = vadd.xlane.f32.xlu0 %v581
    %v625 = vpop.xlane.xlu0 %624
    %626 = vadd.xlane.f32.xlu0 %v582
    %v627 = vpop.xlane.xlu0 %626
    %628 = vadd.xlane.f32.xlu0 %v583
    %v629 = vpop.xlane.xlu0 %628
    %630 = vadd.xlane.f32.xlu0 %v584
    %v631 = vpop.xlane.xlu0 %630
    %632 = vadd.xlane.f32.xlu0 %v585
    %v633 = vpop.xlane.xlu0 %632
    %634 = vadd.xlane.f32.xlu0 %v586
    %v635 = vpop.xlane.xlu0 %634
    %636 = vadd.xlane.f32.xlu0 %v587
    %v637 = vpop.xlane.xlu0 %636
    %638 = vadd.xlane.f32.xlu0 %v588
    %v639 = vpop.xlane.xlu0 %638
    %640 = vadd.xlane.f32.xlu0 %v589
    %v641 = vpop.xlane.xlu0 %640
    %642 = vadd.xlane.f32.xlu0 %v590
    %v643 = vpop.xlane.xlu0 %642
    %644 = vadd.xlane.f32.xlu0 %v591
    %v645 = vpop.xlane.xlu0 %644
    %646 = vadd.xlane.f32.xlu0 %v592
    %v647 = vpop.xlane.xlu0 %646
    %648 = vadd.xlane.f32.xlu0 %v593
    %v649 = vpop.xlane.xlu0 %648
    %650 = vadd.xlane.f32.xlu0 %v594
    %v651 = vpop.xlane.xlu0 %650
    %652 = vadd.xlane.f32.xlu0 %v595
    %v653 = vpop.xlane.xlu0 %652
    %654 = vadd.xlane.f32.xlu0 %v596
    %v655 = vpop.xlane.xlu0 %654
    %656 = vadd.xlane.f32.xlu0 %v597
    %v657 = vpop.xlane.xlu0 %656
    %658 = vadd.xlane.f32.xlu0 %v598
    %v659 = vpop.xlane.xlu0 %658
    %660 = vadd.xlane.f32.xlu0 %v599
    %v661 = vpop.xlane.xlu0 %660
    %662 = vadd.xlane.f32.xlu0 %v600
    %v663 = vpop.xlane.xlu0 %662
    %664 = vadd.xlane.f32.xlu0 %v601
    %v665 = vpop.xlane.xlu0 %664
    %v666 = vrsqrt.pop %v603
    %v667 = vmul.f32 %v603, %v666
    %vm668 = vcmp.eq.f32.partialorder %v603, inf
    %v669 = vsel %vm668, %v603, %v667
    %vm670 = vcmp.eq.f32.partialorder %v603, 0.0
    %v671 = vand.u32 %v603, 2147483648
    %v672 = vsel %vm670, %v671, %v669
    %v673 = vrsqrt.pop %v605
    %v674 = vmul.f32 %v605, %v673
    %vm675 = vcmp.eq.f32.partialorder %v605, inf
    %v676 = vsel %vm675, %v605, %v674
    %vm677 = vcmp.eq.f32.partialorder %v605, 0.0
    %v678 = vand.u32 %v605, 2147483648
    %v679 = vsel %vm677, %v678, %v676
    %v680 = vrsqrt.pop %v607
    %v681 = vmul.f32 %v607, %v680
    %vm682 = vcmp.eq.f32.partialorder %v607, inf
    %v683 = vsel %vm682, %v607, %v681
    %vm684 = vcmp.eq.f32.partialorder %v607, 0.0
    %v685 = vand.u32 %v607, 2147483648
    %v686 = vsel %vm684, %v685, %v683
    %v687 = vrsqrt.pop %v609
    %v688 = vmul.f32 %v609, %v687
    %vm689 = vcmp.eq.f32.partialorder %v609, inf
    %v690 = vsel %vm689, %v609, %v688
    %vm691 = vcmp.eq.f32.partialorder %v609, 0.0
    %v692 = vand.u32 %v609, 2147483648
    %v693 = vsel %vm691, %v692, %v690
    %v694 = vrsqrt.pop %v611
    %v695 = vmul.f32 %v611, %v694
    %vm696 = vcmp.eq.f32.partialorder %v611, inf
    %v697 = vsel %vm696, %v611, %v695
    %vm698 = vcmp.eq.f32.partialorder %v611, 0.0
    %v699 = vand.u32 %v611, 2147483648
    %v700 = vsel %vm698, %v699, %v697
    %v701 = vrsqrt.pop %v613
    %v702 = vmul.f32 %v613, %v701
    %vm703 = vcmp.eq.f32.partialorder %v613, inf
    %v704 = vsel %vm703, %v613, %v702
    %vm705 = vcmp.eq.f32.partialorder %v613, 0.0
    %v706 = vand.u32 %v613, 2147483648
    %v707 = vsel %vm705, %v706, %v704
    %v708 = vrsqrt.pop %v615
    %v709 = vmul.f32 %v615, %v708
    %vm710 = vcmp.eq.f32.partialorder %v615, inf
    %v711 = vsel %vm710, %v615, %v709
    %vm712 = vcmp.eq.f32.partialorder %v615, 0.0
    %v713 = vand.u32 %v615, 2147483648
    %v714 = vsel %vm712, %v713, %v711
    %v715 = vrsqrt.pop %v617
    %v716 = vmul.f32 %v617, %v715
    %vm717 = vcmp.eq.f32.partialorder %v617, inf
    %v718 = vsel %vm717, %v617, %v716
    %vm719 = vcmp.eq.f32.partialorder %v617, 0.0
    %v720 = vand.u32 %v617, 2147483648
    %v721 = vsel %vm719, %v720, %v718
    %v722 = vrsqrt.pop %v619
    %v723 = vmul.f32 %v619, %v722
    %vm724 = vcmp.eq.f32.partialorder %v619, inf
    %v725 = vsel %vm724, %v619, %v723
    %vm726 = vcmp.eq.f32.partialorder %v619, 0.0
    %v727 = vand.u32 %v619, 2147483648
    %v728 = vsel %vm726, %v727, %v725
    %v729 = vrsqrt.pop %v621
    %v730 = vmul.f32 %v621, %v729
    %vm731 = vcmp.eq.f32.partialorder %v621, inf
    %v732 = vsel %vm731, %v621, %v730
    %vm733 = vcmp.eq.f32.partialorder %v621, 0.0
    %v734 = vand.u32 %v621, 2147483648
    %v735 = vsel %vm733, %v734, %v732
    %v736 = vrsqrt.pop %v623
    %v737 = vmul.f32 %v623, %v736
    %vm738 = vcmp.eq.f32.partialorder %v623, inf
    %v739 = vsel %vm738, %v623, %v737
    %vm740 = vcmp.eq.f32.partialorder %v623, 0.0
    %v741 = vand.u32 %v623, 2147483648
    %v742 = vsel %vm740, %v741, %v739
    %v743 = vrsqrt.pop %v625
    %v744 = vmul.f32 %v625, %v743
    %vm745 = vcmp.eq.f32.partialorder %v625, inf
    %v746 = vsel %vm745, %v625, %v744
    %vm747 = vcmp.eq.f32.partialorder %v625, 0.0
    %v748 = vand.u32 %v625, 2147483648
    %v749 = vsel %vm747, %v748, %v746
    %v750 = vrsqrt.pop %v627
    %v751 = vmul.f32 %v627, %v750
    %vm752 = vcmp.eq.f32.partialorder %v627, inf
    %v753 = vsel %vm752, %v627, %v751
    %vm754 = vcmp.eq.f32.partialorder %v627, 0.0
    %v755 = vand.u32 %v627, 2147483648
    %v756 = vsel %vm754, %v755, %v753
    %v757 = vrsqrt.pop %v629
    %v758 = vmul.f32 %v629, %v757
    %vm759 = vcmp.eq.f32.partialorder %v629, inf
    %v760 = vsel %vm759, %v629, %v758
    %vm761 = vcmp.eq.f32.partialorder %v629, 0.0
    %v762 = vand.u32 %v629, 2147483648
    %v763 = vsel %vm761, %v762, %v760
    %v764 = vrsqrt.pop %v631
    %v765 = vmul.f32 %v631, %v764
    %vm766 = vcmp.eq.f32.partialorder %v631, inf
    %v767 = vsel %vm766, %v631, %v765
    %vm768 = vcmp.eq.f32.partialorder %v631, 0.0
    %v769 = vand.u32 %v631, 2147483648
    %v770 = vsel %vm768, %v769, %v767
    %v771 = vrsqrt.pop %v633
    %v772 = vmul.f32 %v633, %v771
    %vm773 = vcmp.eq.f32.partialorder %v633, inf
    %v774 = vsel %vm773, %v633, %v772
    %vm775 = vcmp.eq.f32.partialorder %v633, 0.0
    %v776 = vand.u32 %v633, 2147483648
    %v777 = vsel %vm775, %v776, %v774
    %v778 = vrsqrt.pop %v635
    %v779 = vmul.f32 %v635, %v778
    %vm780 = vcmp.eq.f32.partialorder %v635, inf
    %v781 = vsel %vm780, %v635, %v779
    %vm782 = vcmp.eq.f32.partialorder %v635, 0.0
    %v783 = vand.u32 %v635, 2147483648
    %v784 = vsel %vm782, %v783, %v781
    %v785 = vrsqrt.pop %v637
    %v786 = vmul.f32 %v637, %v785
    %vm787 = vcmp.eq.f32.partialorder %v637, inf
    %v788 = vsel %vm787, %v637, %v786
    %vm789 = vcmp.eq.f32.partialorder %v637, 0.0
    %v790 = vand.u32 %v637, 2147483648
    %v791 = vsel %vm789, %v790, %v788
    %v792 = vrsqrt.pop %v639
    %v793 = vmul.f32 %v639, %v792
    %vm794 = vcmp.eq.f32.partialorder %v639, inf
    %v795 = vsel %vm794, %v639, %v793
    %vm796 = vcmp.eq.f32.partialorder %v639, 0.0
    %v797 = vand.u32 %v639, 2147483648
    %v798 = vsel %vm796, %v797, %v795
    %v799 = vrsqrt.pop %v641
    %v800 = vmul.f32 %v641, %v799
    %vm801 = vcmp.eq.f32.partialorder %v641, inf
    %v802 = vsel %vm801, %v641, %v800
    %vm803 = vcmp.eq.f32.partialorder %v641, 0.0
    %v804 = vand.u32 %v641, 2147483648
    %v805 = vsel %vm803, %v804, %v802
    %v806 = vrsqrt.pop %v643
    %v807 = vmul.f32 %v643, %v806
    %vm808 = vcmp.eq.f32.partialorder %v643, inf
    %v809 = vsel %vm808, %v643, %v807
    %vm810 = vcmp.eq.f32.partialorder %v643, 0.0
    %v811 = vand.u32 %v643, 2147483648
    %v812 = vsel %vm810, %v811, %v809
    %v813 = vrsqrt.pop %v645
    %v814 = vmul.f32 %v645, %v813
    %vm815 = vcmp.eq.f32.partialorder %v645, inf
    %v816 = vsel %vm815, %v645, %v814
    %vm817 = vcmp.eq.f32.partialorder %v645, 0.0
    %v818 = vand.u32 %v645, 2147483648
    %v819 = vsel %vm817, %v818, %v816
    %v820 = vrsqrt.pop %v647
    %v821 = vmul.f32 %v647, %v820
    %vm822 = vcmp.eq.f32.partialorder %v647, inf
    %v823 = vsel %vm822, %v647, %v821
    %vm824 = vcmp.eq.f32.partialorder %v647, 0.0
    %v825 = vand.u32 %v647, 2147483648
    %v826 = vsel %vm824, %v825, %v823
    %v827 = vrsqrt.pop %v649
    %v828 = vmul.f32 %v649, %v827
    %vm829 = vcmp.eq.f32.partialorder %v649, inf
    %v830 = vsel %vm829, %v649, %v828
    %vm831 = vcmp.eq.f32.partialorder %v649, 0.0
    %v832 = vand.u32 %v649, 2147483648
    %v833 = vsel %vm831, %v832, %v830
    %v834 = vrsqrt.pop %v651
    %v835 = vmul.f32 %v651, %v834
    %vm836 = vcmp.eq.f32.partialorder %v651, inf
    %v837 = vsel %vm836, %v651, %v835
    %vm838 = vcmp.eq.f32.partialorder %v651, 0.0
    %v839 = vand.u32 %v651, 2147483648
    %v840 = vsel %vm838, %v839, %v837
    %v841 = vrsqrt.pop %v653
    %v842 = vmul.f32 %v653, %v841
    %vm843 = vcmp.eq.f32.partialorder %v653, inf
    %v844 = vsel %vm843, %v653, %v842
    %vm845 = vcmp.eq.f32.partialorder %v653, 0.0
    %v846 = vand.u32 %v653, 2147483648
    %v847 = vsel %vm845, %v846, %v844
    %v848 = vrsqrt.pop %v655
    %v849 = vmul.f32 %v655, %v848
    %vm850 = vcmp.eq.f32.partialorder %v655, inf
    %v851 = vsel %vm850, %v655, %v849
    %vm852 = vcmp.eq.f32.partialorder %v655, 0.0
    %v853 = vand.u32 %v655, 2147483648
    %v854 = vsel %vm852, %v853, %v851
    %v855 = vrsqrt.pop %v657
    %v856 = vmul.f32 %v657, %v855
    %vm857 = vcmp.eq.f32.partialorder %v657, inf
    %v858 = vsel %vm857, %v657, %v856
    %vm859 = vcmp.eq.f32.partialorder %v657, 0.0
    %v860 = vand.u32 %v657, 2147483648
    %v861 = vsel %vm859, %v860, %v858
    %v862 = vrsqrt.pop %v659
    %v863 = vmul.f32 %v659, %v862
    %vm864 = vcmp.eq.f32.partialorder %v659, inf
    %v865 = vsel %vm864, %v659, %v863
    %vm866 = vcmp.eq.f32.partialorder %v659, 0.0
    %v867 = vand.u32 %v659, 2147483648
    %v868 = vsel %vm866, %v867, %v865
    %v869 = vrsqrt.pop %v661
    %v870 = vmul.f32 %v661, %v869
    %vm871 = vcmp.eq.f32.partialorder %v661, inf
    %v872 = vsel %vm871, %v661, %v870
    %vm873 = vcmp.eq.f32.partialorder %v661, 0.0
    %v874 = vand.u32 %v661, 2147483648
    %v875 = vsel %vm873, %v874, %v872
    %v876 = vrsqrt.pop %v663
    %v877 = vmul.f32 %v663, %v876
    %vm878 = vcmp.eq.f32.partialorder %v663, inf
    %v879 = vsel %vm878, %v663, %v877
    %vm880 = vcmp.eq.f32.partialorder %v663, 0.0
    %v881 = vand.u32 %v663, 2147483648
    %v882 = vsel %vm880, %v881, %v879
    %v883 = vrsqrt.pop %v665
    %v884 = vmul.f32 %v665, %v883
    %vm885 = vcmp.eq.f32.partialorder %v665, inf
    %v886 = vsel %vm885, %v665, %v884
    %vm887 = vcmp.eq.f32.partialorder %v665, 0.0
    %v888 = vand.u32 %v665, 2147483648
    %v889 = vsel %vm887, %v888, %v886
    %v890 = vadd.f32 %v672, 1e-08
    %v891 = vadd.f32 %v679, 1e-08
    %v892 = vadd.f32 %v686, 1e-08
    %v893 = vadd.f32 %v693, 1e-08
    %v894 = vadd.f32 %v700, 1e-08
    %v895 = vadd.f32 %v707, 1e-08
    %v896 = vadd.f32 %v714, 1e-08
    %v897 = vadd.f32 %v721, 1e-08
    %v898 = vadd.f32 %v728, 1e-08
    %v899 = vadd.f32 %v735, 1e-08
    %v900 = vadd.f32 %v742, 1e-08
    %v901 = vadd.f32 %v749, 1e-08
    %v902 = vadd.f32 %v756, 1e-08
    %v903 = vadd.f32 %v763, 1e-08
    %v904 = vadd.f32 %v770, 1e-08
    %v905 = vadd.f32 %v777, 1e-08
    %v906 = vadd.f32 %v784, 1e-08
    %v907 = vadd.f32 %v791, 1e-08
    %v908 = vadd.f32 %v798, 1e-08
    %v909 = vadd.f32 %v805, 1e-08
    %v910 = vadd.f32 %v812, 1e-08
    %v911 = vadd.f32 %v819, 1e-08
    %v912 = vadd.f32 %v826, 1e-08
    %v913 = vadd.f32 %v833, 1e-08
    %v914 = vadd.f32 %v840, 1e-08
    %v915 = vadd.f32 %v847, 1e-08
    %v916 = vadd.f32 %v854, 1e-08
    %v917 = vadd.f32 %v861, 1e-08
    %v918 = vadd.f32 %v868, 1e-08
    %v919 = vadd.f32 %v875, 1e-08
    %v920 = vadd.f32 %v882, 1e-08
    %v921 = vadd.f32 %v889, 1e-08
    %v922 = vrcp.pop %v890
    %v923 = vrcp.pop %v891
    %v924 = vrcp.pop %v892
    %v925 = vrcp.pop %v893
    %v926 = vrcp.pop %v894
    %v927 = vrcp.pop %v895
    %v928 = vrcp.pop %v896
    %v929 = vrcp.pop %v897
    %v930 = vrcp.pop %v898
    %v931 = vrcp.pop %v899
    %v932 = vrcp.pop %v900
    %v933 = vrcp.pop %v901
    %v934 = vrcp.pop %v902
    %v935 = vrcp.pop %v903
    %v936 = vrcp.pop %v904
    %v937 = vrcp.pop %v905
    %v938 = vrcp.pop %v906
    %v939 = vrcp.pop %v907
    %v940 = vrcp.pop %v908
    %v941 = vrcp.pop %v909
    %v942 = vrcp.pop %v910
    %v943 = vrcp.pop %v911
    %v944 = vrcp.pop %v912
    %v945 = vrcp.pop %v913
    %v946 = vrcp.pop %v914
    %v947 = vrcp.pop %v915
    %v948 = vrcp.pop %v916
    %v949 = vrcp.pop %v917
    %v950 = vrcp.pop %v918
    %v951 = vrcp.pop %v919
    %v952 = vrcp.pop %v920
    %v953 = vrcp.pop %v921
    %v954 = vmul.f32 %v538, %v922
    %v955 = vmul.f32 %v539, %v923
    %v956 = vmul.f32 %v540, %v924
    %v957 = vmul.f32 %v541, %v925
    %v958 = vmul.f32 %v542, %v926
    %v959 = vmul.f32 %v543, %v927
    %v960 = vmul.f32 %v544, %v928
    %v961 = vmul.f32 %v545, %v929
    %v962 = vmul.f32 %v546, %v930
    %v963 = vmul.f32 %v547, %v931
    %v964 = vmul.f32 %v548, %v932
    %v965 = vmul.f32 %v549, %v933
    %v966 = vmul.f32 %v550, %v934
    %v967 = vmul.f32 %v551, %v935
    %v968 = vmul.f32 %v552, %v936
    %v969 = vmul.f32 %v553, %v937
    %v970 = vmul.f32 %v554, %v938
    %v971 = vmul.f32 %v555, %v939
    %v972 = vmul.f32 %v556, %v940
    %v973 = vmul.f32 %v557, %v941
    %v974 = vmul.f32 %v558, %v942
    %v975 = vmul.f32 %v559, %v943
    %v976 = vmul.f32 %v560, %v944
    %v977 = vmul.f32 %v561, %v945
    %v978 = vmul.f32 %v562, %v946
    %v979 = vmul.f32 %v563, %v947
    %v980 = vmul.f32 %v564, %v948
    %v981 = vmul.f32 %v565, %v949
    %v982 = vmul.f32 %v566, %v950
    %v983 = vmul.f32 %v567, %v951
    %v984 = vmul.f32 %v568, %v952
    %v985 = vmul.f32 %v569, %v953
    %986 = vst [vmem:[#allocation8] sm:$0xff] %v954
    %987 = vst [vmem:[#allocation8 + $0x8] sm:$0xff] %v955
    %988 = vst [vmem:[#allocation8 + $0x10] sm:$0xff] %v956
    %989 = vst [vmem:[#allocation8 + $0x18] sm:$0xff] %v957
    %990 = vst [vmem:[#allocation8 + $0x20] sm:$0xff] %v958
    %991 = vst [vmem:[#allocation8 + $0x28] sm:$0xff] %v959
    %992 = vst [vmem:[#allocation8 + $0x30] sm:$0xff] %v960
    %993 = vst [vmem:[#allocation8 + $0x38] sm:$0xff] %v961
    %994 = vst [vmem:[#allocation8 + $0x40] sm:$0xff] %v962
    %995 = vst [vmem:[#allocation8 + $0x48] sm:$0xff] %v963
    %996 = vst [vmem:[#allocation8 + $0x50] sm:$0xff] %v964
    %997 = vst [vmem:[#allocation8 + $0x58] sm:$0xff] %v965
    %998 = vst [vmem:[#allocation8 + $0x60] sm:$0xff] %v966
    %999 = vst [vmem:[#allocation8 + $0x68] sm:$0xff] %v967
    %1000 = vst [vmem:[#allocation8 + $0x70] sm:$0xff] %v968
    %1001 = vst [vmem:[#allocation8 + $0x78] sm:$0xff] %v969
    %1002 = vst [vmem:[#allocation8 + $0x80] sm:$0xff] %v970
    %1003 = vst [vmem:[#allocation8 + $0x88] sm:$0xff] %v971
    %1004 = vst [vmem:[#allocation8 + $0x90] sm:$0xff] %v972
    %1005 = vst [vmem:[#allocation8 + $0x98] sm:$0xff] %v973
    %1006 = vst [vmem:[#allocation8 + $0xa0] sm:$0xff] %v974
    %1007 = vst [vmem:[#allocation8 + $0xa8] sm:$0xff] %v975
    %1008 = vst [vmem:[#allocation8 + $0xb0] sm:$0xff] %v976
    %1009 = vst [vmem:[#allocation8 + $0xb8] sm:$0xff] %v977
    %1010 = vst [vmem:[#allocation8 + $0xc0] sm:$0xff] %v978
    %1011 = vst [vmem:[#allocation8 + $0xc8] sm:$0xff] %v979
    %1012 = vst [vmem:[#allocation8 + $0xd0] sm:$0xff] %v980
    %1013 = vst [vmem:[#allocation8 + $0xd8] sm:$0xff] %v981
    %1014 = vst [vmem:[#allocation8 + $0xe0] sm:$0xff] %v982
    %1015 = vst [vmem:[#allocation8 + $0xe8] sm:$0xff] %v983
    %1016 = vst [vmem:[#allocation8 + $0xf0] sm:$0xff] %v984
    %1017 = vst [vmem:[#allocation8 + $0xf8] sm:$0xff] %v985
    // Predicated region
    $region26: #{tpu_custom_call.1} parent=1 // pred_check
      _
    $region27: #{tpu_custom_call.1} parent=1 // pred_check_branch
      %1019 = sbr.rel (0) target = $region29
    $region28: #{tpu_custom_call.1} parent=1 // pred_region
      %s1021 = ssub.s32 4096, 4096
      %1022 = vsyncadd [#allocation5], %s1021
      %s1023 = sshll.u32 [#allocation8], 4
      %s1024 = int_to_ptr.vmem [resolvable:$true] %s1023
      %1029 = dma.vmem_to_hbm [thread:$0]  %s1024, 4096, %s4, [#allocation5], 128, 128, 8
    $region29: #{tpu_custom_call.1} parent=1 // pred_fallthru
      _
    // Predicated region
    $region30: #{tpu_custom_call.1} parent=1 // pred_check
      _
    $region31: #{tpu_custom_call.1} parent=1 // pred_check_branch
      %1031 = sbr.rel (0) target = $region33
    $region32: #{tpu_custom_call.1} parent=1 // pred_region
      %1032 = dma.done [#allocation5], 4096
    $region33: #{tpu_custom_call.1} parent=1 // pred_fallthru
      _
    %1033 = vsyncpa [#allocation4], 1
    %1034 = vsyncpa [#allocation7], 1
    %1035 = vsyncpa [#allocation5], 1

</llo_original>
